<compile_context>
chip_gen: v6e
topology: v6e:2x2x1
jax: 0.10.0
libtpu: 0.0.40
codegen_flags: <defaults>
</compile_context>

<pallas_src>
import functools

import jax
import jax.numpy as jnp
from jax.experimental import pallas as pl
from jax.experimental.pallas import tpu as pltpu


# ----------------------------------------------------------------------------
# Helpers
# ----------------------------------------------------------------------------
def _round_up(x, m):
    return ((x + m - 1) // m) * m


def _apply_activation(h, act):
    """Activation applied in float32 (accumulator dtype)."""
    if act is None or act == "linear":
        return h
    if act == "relu":
        return jnp.maximum(h, 0.0)
    if act == "elu":
        return jnp.where(h > 0, h, jnp.exp(h) - 1.0)
    if act == "leaky_relu":
        return jnp.where(h > 0, h, 0.01 * h)
    if act == "selu":
        scale = 1.0507009873554805
        alpha = 1.6732632423543772
        return scale * jnp.where(h > 0, h, alpha * (jnp.exp(h) - 1.0))
    raise ValueError(f"Unsupported activation function: {act}")


# ----------------------------------------------------------------------------
# Fused MLP Pallas kernel: the entire per-phase network in one kernel body.
# refs = (x_ref, w0, b0, w1, b1, ..., out_ref)
# ----------------------------------------------------------------------------
def _fused_mlp_kernel(*refs, activations):
    x_ref, out_ref = refs[0], refs[-1]
    wb = refs[1:-1]
    n_layers = len(activations)

    h = x_ref[...]  # (TM, K0_pad) in compute dtype (bf16)
    for li, act in enumerate(activations):
        w = wb[2 * li][...]       # (Kin_pad, Kout_pad) compute dtype
        b = wb[2 * li + 1][...]   # (1, Kout_pad) float32
        acc = jnp.dot(h, w, preferred_element_type=jnp.float32)
        acc = acc + b             # bias added exactly once per layer, in f32
        acc = _apply_activation(acc, act)
        # Cast back to the MXU compute dtype for the next matmul; keep the
        # final layer's result in f32 for the output store.
        h = acc.astype(w.dtype) if li + 1 < n_layers else acc

    out_ref[...] = h.astype(out_ref.dtype)


def fused_mlp(x, layers, out_dim, *, block_rows=None):
    """Run the whole MLP (list of padded (w, b, act) layers) in one pallas_call.

    x      : (M, K) float32 logical input (unpadded).
    layers : list of (w_pad, b_pad, act); w_pad is (Kin_pad, Kout_pad) in the
             compute dtype, b_pad is (1, Kout_pad) float32. All padded dims are
             multiples of 128 (lane-dense).
    out_dim: logical output width to slice back out.
    """
    M, K = x.shape
    k0_pad = layers[0][0].shape[0]
    n_pad = layers[-1][0].shape[1]
    compute_dtype = layers[0][0].dtype

    # Row granularity: bf16 packs 2 rows/sublane -> use multiples of 16.
    row_g = 16 if jnp.dtype(compute_dtype).itemsize < 4 else 8
    if block_rows is None:
        # Conservative default that fits scoped VMEM on v5e/v6e/v7x for these
        # layer widths (re-derive / shrink for v7x's 64 MiB if widths grow).
        block_rows = min(128, _round_up(M, row_g))
    block_rows = max(row_g, _round_up(block_rows, row_g))
    m_pad = _round_up(M, block_rows)

    # Zero-pad the input (exact: padded rows/lanes contribute nothing).
    x_p = jnp.pad(x, ((0, m_pad - M), (0, k0_pad - K))).astype(compute_dtype)

    in_specs = [pl.BlockSpec((block_rows, k0_pad), lambda i: (i, 0))]
    flat_args = [x_p]
    flops = 0
    transcendentals = 0
    bytes_accessed = x_p.size * x_p.dtype.itemsize + m_pad * n_pad * 4
    for w_p, b_p, act in layers:
        kin, kout = w_p.shape
        # Constant block index -> fetched once, resident in VMEM across steps.
        in_specs.append(pl.BlockSpec((kin, kout), lambda i: (0, 0)))
        in_specs.append(pl.BlockSpec((1, kout), lambda i: (0, 0)))
        flat_args.extend([w_p, b_p])
        flops += 2 * m_pad * kin * kout
        bytes_accessed += (w_p.size * w_p.dtype.itemsize
                           + b_p.size * b_p.dtype.itemsize)
        if act in ("elu", "selu"):
            transcendentals += m_pad * kout

    acts = tuple(act for _, _, act in layers)

    out = pl.pallas_call(
        functools.partial(_fused_mlp_kernel, activations=acts),
        out_shape=jax.ShapeDtypeStruct((m_pad, n_pad), jnp.float32),
        grid_spec=pltpu.PrefetchScalarGridSpec(
            num_scalar_prefetch=0,
            grid=(m_pad // block_rows,),
            in_specs=in_specs,
            out_specs=pl.BlockSpec((block_rows, n_pad), lambda i: (i, 0)),
        ),
        compiler_params=pltpu.CompilerParams(
            dimension_semantics=("parallel",),
        ),
        cost_estimate=pl.CostEstimate(
            flops=flops,
            transcendentals=transcendentals,
            bytes_accessed=bytes_accessed,
        ),
    )(*flat_args)

    return out[:M, :out_dim]


# ----------------------------------------------------------------------------
# Parameter initialization (mimics nn.Linear default init) + padding/packing.
# ----------------------------------------------------------------------------
def _init_linear(key, in_dim, out_dim):
    kw, kb = jax.random.split(key)
    bound = 1.0 / float(in_dim) ** 0.5
    w = jax.random.uniform(kw, (in_dim, out_dim), jnp.float32, -bound, bound)
    b = jax.random.uniform(kb, (out_dim,), jnp.float32, -bound, bound)
    return w, b


def init_ubp_params(key, *, n_features, num_classes=3,
                    hidden_layer_sizes=(128, 64), latent_dim=64):
    io_dim = n_features * num_classes
    keys = jax.random.split(key, 4 + len(hidden_layer_sizes))
    params = {}
    params["p1_enc"] = _init_linear(keys[0], io_dim, latent_dim)
    params["p1_dec"] = _init_linear(keys[1], latent_dim, io_dim)
    p23 = []
    in_dim = io_dim
    for i, size in enumerate(hidden_layer_sizes):
        p23.append(_init_linear(keys[2 + i], in_dim, size))
        in_dim = size
    p23.append(_init_linear(keys[2 + len(hidden_layer_sizes)], in_dim, latent_dim))
    params["p23_enc"] = p23
    params["p23_dec"] = _init_linear(keys[3 + len(hidden_layer_sizes)], latent_dim, io_dim)
    return params


def _pack_layer(w, b, act, compute_dtype, pad_to=128):
    kin, kout = w.shape
    kin_p, kout_p = _round_up(kin, pad_to), _round_up(kout, pad_to)
    w_p = jnp.pad(w, ((0, kin_p - kin), (0, kout_p - kout))).astype(compute_dtype)
    b_p = jnp.pad(b, (0, kout_p - kout)).reshape(1, kout_p).astype(jnp.float32)
    return w_p, b_p, act


def _phase_layers(params, phase, activation, compute_dtype):
    if phase == 1:
        specs = [(params["p1_enc"], None), (params["p1_dec"], None)]
    else:
        # Dropout after each hidden activation is identity in eval mode.
        specs = [((w, b), activation) for (w, b) in params["p23_enc"][:-1]]
        specs.append((params["p23_enc"][-1], None))
        specs.append((params["p23_dec"], None))
    return [_pack_layer(w, b, act, compute_dtype) for (w, b), act in specs]


# ----------------------------------------------------------------------------
# Forward pass (mirrors UBPModel.forward).
# ----------------------------------------------------------------------------
def ubp_forward(params, x, phase=1, *, activation="relu", block_rows=None,
                compute_dtype=jnp.bfloat16):
    if x.ndim == 3:
        x = x.reshape(x.shape[0], -1)  # torch: x = x.view(x.size(0), -1)
    layers = _phase_layers(params, phase, activation, compute_dtype)
    # PyTorch: reconstructed.view(x.size()); x has already been flattened, so
    # the result keeps the flattened 2-D shape.
    return fused_mlp(x, layers, out_dim=x.shape[1], block_rows=block_rows)


# ----------------------------------------------------------------------------
# Pure-JAX references for correctness checking.
# ----------------------------------------------------------------------------
def ubp_forward_ref(params, x, phase=1, activation="relu",
                    compute_dtype=jnp.bfloat16):
    if x.ndim == 3:
        x = x.reshape(x.shape[0], -1)

    def lin(h, wb):
        w, b = wb
        if compute_dtype is not None:
            h = h.astype(compute_dtype)
            w = w.astype(compute_dtype)
        return jnp.dot(h, w, preferred_element_type=jnp.float32) + b

    if phase == 1:
        return lin(lin(x, params["p1_enc"]), params["p1_dec"])
    h = x
    for wb in params["p23_enc"][:-1]:
        h = _apply_activation(lin(h, wb), activation)
    z = lin(h, params["p23_enc"][-1])
    return lin(z, params["p23_dec"])


if __name__ == "__main__":
    # Small, module-consistent shapes.
    batch = 64
    n_features = 8
    num_classes = 3
    hidden_layer_sizes = (32, 16)
    latent_dim = 16

    key = jax.random.PRNGKey(0)
    pkey, xkey = jax.random.split(key)
    params = init_ubp_params(
        pkey,
        n_features=n_features,
        num_classes=num_classes,
        hidden_layer_sizes=hidden_layer_sizes,
        latent_dim=latent_dim,
    )

    # Input of shape (batch, n_features * num_classes).
    x = jax.random.uniform(xkey, (batch, n_features * num_classes), jnp.float32)

    # block_rows=16 -> 4 grid tiles: exercises the pipelined, "parallel" batch axis.
    fwd1 = jax.jit(functools.partial(ubp_forward, phase=1, block_rows=16))
    fwd2 = jax.jit(functools.partial(ubp_forward, phase=2, block_rows=16))

    out1 = jax.block_until_ready(fwd1(params, x))
    out2 = jax.block_until_ready(fwd2(params, x))

    # Reference with identical bf16-matmul / f32-accumulate math (tight check).
    ref1 = ubp_forward_ref(params, x, phase=1)
    ref2 = ubp_forward_ref(params, x, phase=2)
    # Pure float32 reference (loose check: bf16 matmul rounding only).
    ref1_f32 = ubp_forward_ref(params, x, phase=1, compute_dtype=None)
    ref2_f32 = ubp_forward_ref(params, x, phase=2, compute_dtype=None)

    assert out1.shape == x.shape and out2.shape == x.shape
    assert jnp.allclose(out1, ref1, atol=1e-4, rtol=1e-4), \
        float(jnp.max(jnp.abs(out1 - ref1)))
    assert jnp.allclose(out2, ref2, atol=1e-4, rtol=1e-4), \
        float(jnp.max(jnp.abs(out2 - ref2)))
    assert jnp.allclose(out1, ref1_f32, atol=5e-2, rtol=5e-2)
    assert jnp.allclose(out2, ref2_f32, atol=5e-2, rtol=5e-2)

    # Phase 3 takes the identical code path as phase 2 (same packed layers);
    # verify structurally instead of recompiling a third kernel.
    l2 = _phase_layers(params, 2, "relu", jnp.bfloat16)
    l3 = _phase_layers(params, 3, "relu", jnp.bfloat16)
    assert len(l2) == len(l3)
    for (w2, b2, a2), (w3, b3, a3) in zip(l2, l3):
        assert a2 == a3
        assert jnp.array_equal(w2, w3) and jnp.array_equal(b2, b3)

    # 3-D input path: flattened before the MLP, returned flattened (matches torch).
    x3 = x.reshape(batch, n_features, num_classes)
    out3 = jax.block_until_ready(fwd1(params, x3))
    assert out3.shape == (batch, n_features * num_classes)
    assert jnp.allclose(out3, out1, atol=1e-6, rtol=1e-6)

    print("KERNEL_OK")
</pallas_src>

<mosaic_0001>
module attributes {stable_mosaic.version = 11 : i64} {
  func.func @_fused_mlp_kernel(%arg0: i32, %arg1: memref<16x128xbf16, #tpu.memory_space<vmem>>, %arg2: memref<128x128xbf16, #tpu.memory_space<vmem>>, %arg3: memref<1x128xf32, #tpu.memory_space<vmem>>, %arg4: memref<128x128xbf16, #tpu.memory_space<vmem>>, %arg5: memref<1x128xf32, #tpu.memory_space<vmem>>, %arg6: memref<16x128xf32, #tpu.memory_space<vmem>>) attributes {dimension_semantics = [#tpu.dimension_semantics<parallel>], iteration_bounds = array<i64: 4>, scalar_prefetch = 0 : i64, scratch_operands = 0 : i64, tpu.core_type = #tpu.core_type<tc>, window_params = [{transform_indices = @transform_0, window_bounds = array<i64: 16, 128>}, {pipeline_mode = #tpu.pipeline_mode<synchronous>, transform_indices = @transform_1, window_bounds = array<i64: 128, 128>}, {pipeline_mode = #tpu.pipeline_mode<synchronous>, transform_indices = @transform_2, window_bounds = array<i64: 1, 128>}, {pipeline_mode = #tpu.pipeline_mode<synchronous>, transform_indices = @transform_3, window_bounds = array<i64: 128, 128>}, {pipeline_mode = #tpu.pipeline_mode<synchronous>, transform_indices = @transform_4, window_bounds = array<i64: 1, 128>}, {transform_indices = @transform_5, window_bounds = array<i64: 16, 128>}]} {
    %c0 = arith.constant 0 : index
    %c0_0 = arith.constant 0 : index
    %0 = vector.load %arg1[%c0, %c0_0] : memref<16x128xbf16, #tpu.memory_space<vmem>>, vector<16x128xbf16>
    %c0_1 = arith.constant 0 : index
    %c0_2 = arith.constant 0 : index
    %1 = vector.load %arg2[%c0_1, %c0_2] : memref<128x128xbf16, #tpu.memory_space<vmem>>, vector<128x128xbf16>
    %c0_3 = arith.constant 0 : index
    %c0_4 = arith.constant 0 : index
    %2 = vector.load %arg3[%c0_3, %c0_4] : memref<1x128xf32, #tpu.memory_space<vmem>>, vector<1x128xf32>
    %cst = arith.constant dense<0.000000e+00> : vector<16x128xf32>
    %3 = tpu.matmul %0, %1, %cst {dimension_numbers = #tpu.dot_dimension_numbers<[1], [0], [0], [1], [0, 0, 1, 1], [], []>} : vector<16x128xbf16>, vector<128x128xbf16>, vector<16x128xf32> -> vector<16x128xf32>
    %4 = vector.broadcast %2 : vector<1x128xf32> to vector<16x128xf32>
    %5 = arith.addf %3, %4 : vector<16x128xf32>
    %6 = arith.truncf %5 : vector<16x128xf32> to vector<16x128xbf16>
    %c0_5 = arith.constant 0 : index
    %c0_6 = arith.constant 0 : index
    %7 = vector.load %arg4[%c0_5, %c0_6] : memref<128x128xbf16, #tpu.memory_space<vmem>>, vector<128x128xbf16>
    %c0_7 = arith.constant 0 : index
    %c0_8 = arith.constant 0 : index
    %8 = vector.load %arg5[%c0_7, %c0_8] : memref<1x128xf32, #tpu.memory_space<vmem>>, vector<1x128xf32>
    %cst_9 = arith.constant dense<0.000000e+00> : vector<16x128xf32>
    %9 = tpu.matmul %6, %7, %cst_9 {dimension_numbers = #tpu.dot_dimension_numbers<[1], [0], [0], [1], [0, 0, 1, 1], [], []>} : vector<16x128xbf16>, vector<128x128xbf16>, vector<16x128xf32> -> vector<16x128xf32>
    %10 = vector.broadcast %8 : vector<1x128xf32> to vector<16x128xf32>
    %11 = arith.addf %9, %10 : vector<16x128xf32>
    %c0_10 = arith.constant 0 : index
    %c0_11 = arith.constant 0 : index
    %12 = vector.load %arg6[%c0_10, %c0_11] : memref<16x128xf32, #tpu.memory_space<vmem>>, vector<16x128xf32>
    tpu.vector_store %arg6[%c0_10, %c0_11], %11 {strides = array<i32>} : memref<16x128xf32, #tpu.memory_space<vmem>>, vector<16x128xf32>,
    return
  }
  func.func @transform_0(%arg0: i32) -> (i32, i32) {
    %c0_i32 = arith.constant 0 : i32
    %c0_i32_0 = arith.constant 0 : i32
    return %arg0, %c0_i32 : i32, i32
  }
  func.func @transform_1(%arg0: i32) -> (i32, i32) {
    %c0_i32 = arith.constant 0 : i32
    %c0_i32_0 = arith.constant 0 : i32
    %c0_i32_1 = arith.constant 0 : i32
    return %c0_i32, %c0_i32_0 : i32, i32
  }
  func.func @transform_2(%arg0: i32) -> (i32, i32) {
    %c0_i32 = arith.constant 0 : i32
    %c0_i32_0 = arith.constant 0 : i32
    %c0_i32_1 = arith.constant 0 : i32
    return %c0_i32, %c0_i32_0 : i32, i32
  }
  func.func @transform_3(%arg0: i32) -> (i32, i32) {
    %c0_i32 = arith.constant 0 : i32
    %c0_i32_0 = arith.constant 0 : i32
    %c0_i32_1 = arith.constant 0 : i32
    return %c0_i32, %c0_i32_0 : i32, i32
  }
  func.func @transform_4(%arg0: i32) -> (i32, i32) {
    %c0_i32 = arith.constant 0 : i32
    %c0_i32_0 = arith.constant 0 : i32
    %c0_i32_1 = arith.constant 0 : i32
    return %c0_i32, %c0_i32_0 : i32, i32
  }
  func.func @transform_5(%arg0: i32) -> (i32, i32) {
    %c0_i32 = arith.constant 0 : i32
    %c0_i32_0 = arith.constant 0 : i32
    return %arg0, %c0_i32 : i32, i32
  }
}

</mosaic_0001>

<llo_original>
// kernel: ubp_forward.1
$region0: #{ubp_forward.1}
  #allocation0 [shape = 'u32[]', space=smem, size = 0x4, offset = 0x4, fixed_abs, tag = 'smem constant byte address 0x4 - core index']
  #allocation1 [shape = 'u32[144,128]{1,0:T(1,128)}', space=vmem, size = 0x12000, scoped, tag = 'internal scratch']
  %s0 = inlined_call_operand.vmem [shape: bf16[64,128], index: 0, kind: input, shape index: {}]
  %s1 = inlined_call_operand.vmem [shape: bf16[128,128], index: 1, kind: input, shape index: {}]
  %s2 = inlined_call_operand.vmem [shape: f32[1,128], index: 2, kind: input, shape index: {}]
  %s3 = inlined_call_operand.vmem [shape: bf16[128,128], index: 3, kind: input, shape index: {}]
  %s4 = inlined_call_operand.vmem [shape: f32[1,128], index: 4, kind: input, shape index: {}]
  %s5 = inlined_call_operand.vmem [shape: f32[64,128], index: 5, kind: output, shape index: {}]
  %s6 = sld [smem:[#allocation0]]
  $region53: #{ubp_forward.1} parent=0
    _
  %s8 = ssub.s32 1, %s6
  %s9 = scalar_select 0, %s8, %s6
  loop: start=0, step=1, limit=6
  $region2: #{ubp_forward.1} parent=0 // loop_pre_header
    _
  $region3: #{ubp_forward.1} parent=0 // loop_header
    %s11 = sphi 0, %s15
    %p12 = scmp.ge.s32.totalorder %s11, 6
    %s21 = sphi 0, %s23
    %s24 = sphi 0, %s21
    %s25 = sphi 0, %s24
    %s41 = sphi 0, %s25
    %s45 = sphi 0, %s45
    %s47 = sphi 0, %s45
    %s48 = sphi 0, %s47
    %s62 = sphi 0, %s48
    %s66 = sphi 0, %s66
    %s68 = sphi 0, %s66
    %s69 = sphi 0, %s68
    %s83 = sphi 0, %s69
    %s87 = sphi 0, %s87
    %s89 = sphi 0, %s87
    %s90 = sphi 0, %s89
    %s104 = sphi 0, %s90
    %s108 = sphi 0, %s108
    %s110 = sphi 0, %s108
    %s111 = sphi 0, %s110
    %s125 = sphi 0, %s111
    %s131 = sphi 0, %s133
    %s134 = sphi 0, %s131
    %s135 = sphi 0, %s134
    %s151 = sphi 0, %s135
  $region4: #{ubp_forward.1} parent=0 // loop_header_branch
    %14 = sbr.rel (%p12) target = $region8
  $region5: #{ubp_forward.1} parent=0 // loop_body
    %s16 = ssub.s32 %s11, 1
    %s17 = ssub.s32 %s11, 2
    %s18 = sadd.s32 %s11, 1
    %s19 = ssub.s32 %s11, %s18
    %p20 = scmp.eq.s32.totalorder %s19, 0
    %s22 = sadd.s32 %s21, 1
    %s23 = scalar_select %p20, %s21, %s22
    %p26 = pneg %p20
    %p27 = scmp.eq.s32.totalorder %s11, 3
    %p28 = por %p26, %p27
    %p29 = scmp.ne.s32.totalorder %s21, %s24
    %p30 = scmp.eq.s32.totalorder %s11, 0
    %p31 = por %p29, %p30
    %p32 = scmp.ne.s32.totalorder %s21, %s24
    %p33 = scmp.eq.s32.totalorder %s16, 3
    %p34 = por %p32, %p33
    %p35 = scmp.ne.s32.totalorder %s24, %s25
    %p36 = scmp.eq.s32.totalorder %s16, 0
    %p37 = por %p35, %p36
    %p38 = scmp.ne.s32.totalorder %s24, %s25
    %p39 = scmp.eq.s32.totalorder %s17, 3
    %p40 = por %p38, %p39
    %p42 = scmp.ne.s32.totalorder %s25, %s41
    %p43 = scmp.eq.s32.totalorder %s17, 0
    %p44 = por %p42, %p43
    %s46 = sadd.s32 %s45, 1
    %p49 = scmp.eq.s32.totalorder %s11, 3
    %p50 = scmp.ne.s32.totalorder %s45, %s47
    %p51 = scmp.eq.s32.totalorder %s11, 0
    %p52 = por %p50, %p51
    %p53 = scmp.ne.s32.totalorder %s45, %s47
    %p54 = scmp.eq.s32.totalorder %s16, 3
    %p55 = por %p53, %p54
    %p56 = scmp.ne.s32.totalorder %s47, %s48
    %p57 = scmp.eq.s32.totalorder %s16, 0
    %p58 = por %p56, %p57
    %p59 = scmp.ne.s32.totalorder %s47, %s48
    %p60 = scmp.eq.s32.totalorder %s17, 3
    %p61 = por %p59, %p60
    %p63 = scmp.ne.s32.totalorder %s48, %s62
    %p64 = scmp.eq.s32.totalorder %s17, 0
    %p65 = por %p63, %p64
    %s67 = sadd.s32 %s66, 1
    %p70 = scmp.eq.s32.totalorder %s11, 3
    %p71 = scmp.ne.s32.totalorder %s66, %s68
    %p72 = scmp.eq.s32.totalorder %s11, 0
    %p73 = por %p71, %p72
    %p74 = scmp.ne.s32.totalorder %s66, %s68
    %p75 = scmp.eq.s32.totalorder %s16, 3
    %p76 = por %p74, %p75
    %p77 = scmp.ne.s32.totalorder %s68, %s69
    %p78 = scmp.eq.s32.totalorder %s16, 0
    %p79 = por %p77, %p78
    %p80 = scmp.ne.s32.totalorder %s68, %s69
    %p81 = scmp.eq.s32.totalorder %s17, 3
    %p82 = por %p80, %p81
    %p84 = scmp.ne.s32.totalorder %s69, %s83
    %p85 = scmp.eq.s32.totalorder %s17, 0
    %p86 = por %p84, %p85
    %s88 = sadd.s32 %s87, 1
    %p91 = scmp.eq.s32.totalorder %s11, 3
    %p92 = scmp.ne.s32.totalorder %s87, %s89
    %p93 = scmp.eq.s32.totalorder %s11, 0
    %p94 = por %p92, %p93
    %p95 = scmp.ne.s32.totalorder %s87, %s89
    %p96 = scmp.eq.s32.totalorder %s16, 3
    %p97 = por %p95, %p96
    %p98 = scmp.ne.s32.totalorder %s89, %s90
    %p99 = scmp.eq.s32.totalorder %s16, 0
    %p100 = por %p98, %p99
    %p101 = scmp.ne.s32.totalorder %s89, %s90
    %p102 = scmp.eq.s32.totalorder %s17, 3
    %p103 = por %p101, %p102
    %p105 = scmp.ne.s32.totalorder %s90, %s104
    %p106 = scmp.eq.s32.totalorder %s17, 0
    %p107 = por %p105, %p106
    %s109 = sadd.s32 %s108, 1
    %p112 = scmp.eq.s32.totalorder %s11, 3
    %p113 = scmp.ne.s32.totalorder %s108, %s110
    %p114 = scmp.eq.s32.totalorder %s11, 0
    %p115 = por %p113, %p114
    %p116 = scmp.ne.s32.totalorder %s108, %s110
    %p117 = scmp.eq.s32.totalorder %s16, 3
    %p118 = por %p116, %p117
    %p119 = scmp.ne.s32.totalorder %s110, %s111
    %p120 = scmp.eq.s32.totalorder %s16, 0
    %p121 = por %p119, %p120
    %p122 = scmp.ne.s32.totalorder %s110, %s111
    %p123 = scmp.eq.s32.totalorder %s17, 3
    %p124 = por %p122, %p123
    %p126 = scmp.ne.s32.totalorder %s111, %s125
    %p127 = scmp.eq.s32.totalorder %s17, 0
    %p128 = por %p126, %p127
    %s129 = ssub.s32 %s11, %s18
    %p130 = scmp.eq.s32.totalorder %s129, 0
    %s132 = sadd.s32 %s131, 1
    %s133 = scalar_select %p130, %s131, %s132
    %p136 = pneg %p130
    %p137 = scmp.eq.s32.totalorder %s11, 3
    %p138 = por %p136, %p137
    %p139 = scmp.ne.s32.totalorder %s131, %s134
    %p140 = scmp.eq.s32.totalorder %s11, 0
    %p141 = por %p139, %p140
    %p142 = scmp.ne.s32.totalorder %s131, %s134
    %p143 = scmp.eq.s32.totalorder %s16, 3
    %p144 = por %p142, %p143
    %p145 = scmp.ne.s32.totalorder %s134, %s135
    %p146 = scmp.eq.s32.totalorder %s16, 0
    %p147 = por %p145, %p146
    %p148 = scmp.ne.s32.totalorder %s134, %s135
    %p149 = scmp.eq.s32.totalorder %s17, 3
    %p150 = por %p148, %p149
    %p152 = scmp.ne.s32.totalorder %s135, %s151
    %p153 = scmp.eq.s32.totalorder %s17, 0
    %p154 = por %p152, %p153
    %p155 = scmp.le.s32.totalorder 1, %s11
    %p156 = scmp.lt.s32.totalorder %s11, 5
    %p157 = pnand %p155, %p156
    %p158 = pneg %p157
    // Predicated region
    $region9: #{ubp_forward.1} parent=5 // pred_check
      _
    $region10: #{ubp_forward.1} parent=5 // pred_check_branch
      %160 = sbr.rel (%p157) target = $region12
    $region11: #{ubp_forward.1} parent=5 // pred_region
      %s161 = ssub.s32 %s11, 1
      // Predicated region
      $region13: #{ubp_forward.1} parent=11 // pred_check
        %p162 = pneg %p58
      $region14: #{ubp_forward.1} parent=11 // pred_check_branch
        %164 = sbr.rel (%p162) target = $region16
      $region15: #{ubp_forward.1} parent=11 // pred_region
        _
      $region16: #{ubp_forward.1} parent=11 // pred_fallthru
        _
      // Predicated region
      $region17: #{ubp_forward.1} parent=11 // pred_check
        %p165 = pneg %p79
      $region18: #{ubp_forward.1} parent=11 // pred_check_branch
        %167 = sbr.rel (%p165) target = $region20
      $region19: #{ubp_forward.1} parent=11 // pred_region
        _
      $region20: #{ubp_forward.1} parent=11 // pred_fallthru
        _
      // Predicated region
      $region21: #{ubp_forward.1} parent=11 // pred_check
        %p168 = pneg %p100
      $region22: #{ubp_forward.1} parent=11 // pred_check_branch
        %170 = sbr.rel (%p168) target = $region24
      $region23: #{ubp_forward.1} parent=11 // pred_region
        _
      $region24: #{ubp_forward.1} parent=11 // pred_fallthru
        _
      // Predicated region
      $region25: #{ubp_forward.1} parent=11 // pred_check
        %p171 = pneg %p121
      $region26: #{ubp_forward.1} parent=11 // pred_check_branch
        %173 = sbr.rel (%p171) target = $region28
      $region27: #{ubp_forward.1} parent=11 // pred_region
        _
      $region28: #{ubp_forward.1} parent=11 // pred_fallthru
        _
    $region12: #{ubp_forward.1} parent=5 // pred_fallthru
      _
    %p174 = scmp.lt.s32.totalorder %s11, 4
    // Predicated region
    $region29: #{ubp_forward.1} parent=5 // pred_check
      %p175 = pneg %p174
    $region30: #{ubp_forward.1} parent=5 // pred_check_branch
      %177 = sbr.rel (%p175) target = $region32
    $region31: #{ubp_forward.1} parent=5 // pred_region
      // Predicated region
      $region33: #{ubp_forward.1} parent=31 // pred_check
        %p178 = pneg %p31
      $region34: #{ubp_forward.1} parent=31 // pred_check_branch
        %180 = sbr.rel (%p178) target = $region36
      $region35: #{ubp_forward.1} parent=31 // pred_region
        %s181 = smul.u32 2, %s11
        %p182 = scmp.lt.s32.totalorder %s181, 7
        %s183 = scalar_select %p182, %s181, 7
        %s184 = smul.addr %s183, 4
        %s185 = scalar_lea.vmem %s0, %s184
        %s186 = smul.u32 2, %s11
      $region36: #{ubp_forward.1} parent=31 // pred_fallthru
        _
    $region32: #{ubp_forward.1} parent=5 // pred_fallthru
      _
    %p187 = scmp.le.s32.totalorder 1, %s11
    %p188 = scmp.lt.s32.totalorder %s11, 5
    %p189 = pnand %p187, %p188
    %p190 = pneg %p189
    // Predicated region
    $region37: #{ubp_forward.1} parent=5 // pred_check
      _
    $region38: #{ubp_forward.1} parent=5 // pred_check_branch
      %192 = sbr.rel (%p189) target = $region40
    $region39: #{ubp_forward.1} parent=5 // pred_region
      %s193 = ssub.s32 %s11, 1
      %s194 = smul.u32 2, %s16
      %p195 = scmp.lt.s32.totalorder %s194, 7
      %s196 = scalar_select %p195, %s194, 7
      %s197 = smul.addr %s196, 4
      %s198 = scalar_lea.vmem %s0, %s197
      %p199 = pneg %p37
      %p200 = pneg %p34
      %p201 = pneg %p58
      %p202 = pneg %p55
      %p203 = pneg %p79
      %p204 = pneg %p76
      %p205 = pneg %p100
      %p206 = pneg %p97
      %p207 = pneg %p121
      %p208 = pneg %p118
      %p209 = pneg %p147
      %p210 = pneg %p144
      %s211 = smul.u32 2, %s16
      %p212 = scmp.lt.s32.totalorder %s211, 7
      %s213 = scalar_select %p212, %s211, 7
      %s214 = smul.addr %s213, 8
      %s215 = scalar_lea.vmem %s5, %s214
      %s216 = smul.u32 2, %s16
      %p217 = scmp.lt.s32.totalorder %s216, 7
      %s218 = scalar_select %p217, %s216, 7
      %s219 = smul.addr %s218, 4
      %s220 = scalar_lea.vmem %s0, %s219
      %s221 = smul.u32 2, %s16
      %s222 = smul.u32 2, %s16
      %p223 = scmp.lt.s32.totalorder %s222, 7
      %s224 = scalar_select %p223, %s222, 7
      %s225 = smul.addr %s224, 8
      %s226 = scalar_lea.vmem %s5, %s225
      %s227 = smul.u32 2, %s16
      %v229 = vld [vmem:[%s220] sm:$0xf]
      %v230 = vld [vmem:[%s220 + $0x4] sm:$0xf]
      %v231 = vld [vmem:[%s1] sm:$0xf]
      %v232 = vld [vmem:[%s1 + $0x4] sm:$0xf]
      %v233 = vld [vmem:[%s1 + $0x8] sm:$0xf]
      %v234 = vld [vmem:[%s1 + $0xc] sm:$0xf]
      %v235 = vld [vmem:[%s1 + $0x10] sm:$0xf]
      %v236 = vld [vmem:[%s1 + $0x14] sm:$0xf]
      %v237 = vld [vmem:[%s1 + $0x18] sm:$0xf]
      %v238 = vld [vmem:[%s1 + $0x1c] sm:$0xf]
      %v239 = vld [vmem:[%s1 + $0x20] sm:$0xf]
      %v240 = vld [vmem:[%s1 + $0x24] sm:$0xf]
      %v241 = vld [vmem:[%s1 + $0x28] sm:$0xf]
      %v242 = vld [vmem:[%s1 + $0x2c] sm:$0xf]
      %v243 = vld [vmem:[%s1 + $0x30] sm:$0xf]
      %v244 = vld [vmem:[%s1 + $0x34] sm:$0xf]
      %v245 = vld [vmem:[%s1 + $0x38] sm:$0xf]
      %v246 = vld [vmem:[%s1 + $0x3c] sm:$0xf]
      %v247 = vld [vmem:[%s2] sm:$0x1]
      %v249 = vlaneseq
      %v250 = vshrl.u32 %v249, 7
      %v251 = vsub.s32 0, %v250
      %v252 = vrot.slane %v247, %v251
      %v256 = vunpack.c.l.b16 %v229
      %v257 = vunpack.c.l.b16 %v230
      %v258 = vpack.c.b16 %v257, %v256
      %v276 = vunpack.c.l.b16 %v231
      %v277 = vunpack.c.l.b16 %v232
      %v278 = vunpack.c.l.b16 %v233
      %v279 = vunpack.c.l.b16 %v234
      %v280 = vunpack.c.l.b16 %v235
      %v281 = vunpack.c.l.b16 %v236
      %v282 = vunpack.c.l.b16 %v237
      %v283 = vunpack.c.l.b16 %v238
      %v284 = vunpack.c.l.b16 %v239
      %v285 = vunpack.c.l.b16 %v240
      %v286 = vunpack.c.l.b16 %v241
      %v287 = vunpack.c.l.b16 %v242
      %v288 = vunpack.c.l.b16 %v243
      %v289 = vunpack.c.l.b16 %v244
      %v290 = vunpack.c.l.b16 %v245
      %v291 = vunpack.c.l.b16 %v246
      %v292 = vpack.c.b16 %v277, %v276
      %v293 = vpack.c.b16 %v279, %v278
      %v294 = vpack.c.b16 %v281, %v280
      %v295 = vpack.c.b16 %v283, %v282
      %v296 = vpack.c.b16 %v285, %v284
      %v297 = vpack.c.b16 %v287, %v286
      %v298 = vpack.c.b16 %v289, %v288
      %v299 = vpack.c.b16 %v291, %v290
      %308 = vmatprep.subr.bf16.mxu0 0
      %309 = vmatpush1.bf16.msra.mxu0 %v299
      %310 = vmatprep.subr.bf16.mxu0 0
      %311 = vmatpush1.bf16.msra.mxu0 %v298
      %312 = vmatprep.subr.bf16.mxu0 0
      %313 = vmatpush1.bf16.msra.mxu0 %v297
      %314 = vmatprep.subr.bf16.mxu0 0
      %315 = vmatpush1.bf16.msra.mxu0 %v296
      %316 = vmatprep.subr.bf16.mxu0 0
      %317 = vmatpush1.bf16.msra.mxu0 %v295
      %318 = vmatprep.subr.bf16.mxu0 0
      %319 = vmatpush1.bf16.msra.mxu0 %v294
      %320 = vmatprep.subr.bf16.mxu0 0
      %321 = vmatpush1.bf16.msra.mxu0 %v293
      %322 = vmatprep.subr.bf16.mxu0 0
      %323 = vmatpush1.bf16.msra.mxu0 %v292
      %324 = vmatprep.subr.bf16.mxu0 0
      %325 = vmatpush2.bf16.msra.mxu0 0
      %326 = vmatprep.subr.bf16.mxu0 0
      %327 = vmatpush2.bf16.msra.mxu0 0
      %328 = vmatprep.subr.bf16.mxu0 0
      %329 = vmatpush2.bf16.msra.mxu0 0
      %330 = vmatprep.subr.bf16.mxu0 0
      %331 = vmatpush2.bf16.msra.mxu0 0
      %332 = vmatprep.subr.bf16.mxu0 0
      %333 = vmatpush2.bf16.msra.mxu0 0
      %334 = vmatprep.subr.bf16.mxu0 0
      %335 = vmatpush2.bf16.msra.mxu0 0
      %336 = vmatprep.subr.bf16.mxu0 0
      %337 = vmatpush2.bf16.msra.mxu0 0
      %338 = vmatprep.subr.bf16.mxu0 0
      %339 = vmatpush2.bf16.msra.mxu0 0
      %340 = vmatprep.mubr.bf16.mxu0 0
      %341 = vmatmul.mubr.bf16.gmra.mxu0 %v258
      %v342 = vpop.f32.mrf.mxu0
      %v343 = vadd.f32 %v252, %v342
      %v344 = vpop.f32.mrf.mxu0
      %v345 = vpop.f32.mrf.mxu0
      %v346 = vadd.f32 %v252, %v345
      %v347 = vpop.f32.mrf.mxu0
      %348 = vdwg.mxu0
      %v349 = vpack.c.bf16 %v346, %v343
      %v350 = vld [vmem:[%s3] sm:$0xf]
      %v351 = vld [vmem:[%s3 + $0x4] sm:$0xf]
      %v352 = vld [vmem:[%s3 + $0x8] sm:$0xf]
      %v353 = vld [vmem:[%s3 + $0xc] sm:$0xf]
      %v354 = vld [vmem:[%s3 + $0x10] sm:$0xf]
      %v355 = vld [vmem:[%s3 + $0x14] sm:$0xf]
      %v356 = vld [vmem:[%s3 + $0x18] sm:$0xf]
      %v357 = vld [vmem:[%s3 + $0x1c] sm:$0xf]
      %v358 = vld [vmem:[%s3 + $0x20] sm:$0xf]
      %v359 = vld [vmem:[%s3 + $0x24] sm:$0xf]
      %v360 = vld [vmem:[%s3 + $0x28] sm:$0xf]
      %v361 = vld [vmem:[%s3 + $0x2c] sm:$0xf]
      %v362 = vld [vmem:[%s3 + $0x30] sm:$0xf]
      %v363 = vld [vmem:[%s3 + $0x34] sm:$0xf]
      %v364 = vld [vmem:[%s3 + $0x38] sm:$0xf]
      %v365 = vld [vmem:[%s3 + $0x3c] sm:$0xf]
      %v366 = vld [vmem:[%s4] sm:$0x1]
      %v368 = vlaneseq
      %v369 = vshrl.u32 %v368, 7
      %v370 = vsub.s32 0, %v369
      %v371 = vrot.slane %v366, %v370
      %v389 = vunpack.c.l.b16 %v350
      %v390 = vunpack.c.l.b16 %v351
      %v391 = vunpack.c.l.b16 %v352
      %v392 = vunpack.c.l.b16 %v353
      %v393 = vunpack.c.l.b16 %v354
      %v394 = vunpack.c.l.b16 %v355
      %v395 = vunpack.c.l.b16 %v356
      %v396 = vunpack.c.l.b16 %v357
      %v397 = vunpack.c.l.b16 %v358
      %v398 = vunpack.c.l.b16 %v359
      %v399 = vunpack.c.l.b16 %v360
      %v400 = vunpack.c.l.b16 %v361
      %v401 = vunpack.c.l.b16 %v362
      %v402 = vunpack.c.l.b16 %v363
      %v403 = vunpack.c.l.b16 %v364
      %v404 = vunpack.c.l.b16 %v365
      %v405 = vpack.c.b16 %v390, %v389
      %v406 = vpack.c.b16 %v392, %v391
      %v407 = vpack.c.b16 %v394, %v393
      %v408 = vpack.c.b16 %v396, %v395
      %v409 = vpack.c.b16 %v398, %v397
      %v410 = vpack.c.b16 %v400, %v399
      %v411 = vpack.c.b16 %v402, %v401
      %v412 = vpack.c.b16 %v404, %v403
      %421 = vmatprep.subr.bf16.mxu0 0
      %422 = vmatpush1.bf16.msra.mxu0 %v412
      %423 = vmatprep.subr.bf16.mxu0 0
      %424 = vmatpush1.bf16.msra.mxu0 %v411
      %425 = vmatprep.subr.bf16.mxu0 0
      %426 = vmatpush1.bf16.msra.mxu0 %v410
      %427 = vmatprep.subr.bf16.mxu0 0
      %428 = vmatpush1.bf16.msra.mxu0 %v409
      %429 = vmatprep.subr.bf16.mxu0 0
      %430 = vmatpush1.bf16.msra.mxu0 %v408
      %431 = vmatprep.subr.bf16.mxu0 0
      %432 = vmatpush1.bf16.msra.mxu0 %v407
      %433 = vmatprep.subr.bf16.mxu0 0
      %434 = vmatpush1.bf16.msra.mxu0 %v406
      %435 = vmatprep.subr.bf16.mxu0 0
      %436 = vmatpush1.bf16.msra.mxu0 %v405
      %437 = vmatprep.subr.bf16.mxu0 0
      %438 = vmatpush2.bf16.msra.mxu0 0
      %439 = vmatprep.subr.bf16.mxu0 0
      %440 = vmatpush2.bf16.msra.mxu0 0
      %441 = vmatprep.subr.bf16.mxu0 0
      %442 = vmatpush2.bf16.msra.mxu0 0
      %443 = vmatprep.subr.bf16.mxu0 0
      %444 = vmatpush2.bf16.msra.mxu0 0
      %445 = vmatprep.subr.bf16.mxu0 0
      %446 = vmatpush2.bf16.msra.mxu0 0
      %447 = vmatprep.subr.bf16.mxu0 0
      %448 = vmatpush2.bf16.msra.mxu0 0
      %449 = vmatprep.subr.bf16.mxu0 0
      %450 = vmatpush2.bf16.msra.mxu0 0
      %451 = vmatprep.subr.bf16.mxu0 0
      %452 = vmatpush2.bf16.msra.mxu0 0
      %453 = vmatprep.mubr.bf16.mxu0 0
      %454 = vmatmul.mubr.bf16.gmra.mxu0 %v349
      %v455 = vpop.f32.mrf.mxu0
      %v456 = vadd.f32 %v371, %v455
      %v457 = vpop.f32.mrf.mxu0
      %v458 = vpop.f32.mrf.mxu0
      %v459 = vadd.f32 %v371, %v458
      %v460 = vpop.f32.mrf.mxu0
      %461 = vdwg.mxu0
      %462 = vst [vmem:[%s226] sm:$0xff] %v456
      %463 = vst [vmem:[%s226 + $0x8] sm:$0xff] %v459
      %s464 = smul.u32 2, %s16
      %p465 = scmp.lt.s32.totalorder %s464, 7
      %s466 = scalar_select %p465, %s464, 7
      %s467 = smul.addr %s466, 8
      %s468 = scalar_lea.vmem %s5, %s467
      // Predicated region
      $region41: #{ubp_forward.1} parent=39 // pred_check
        %p469 = pneg %p144
      $region42: #{ubp_forward.1} parent=39 // pred_check_branch
        %471 = sbr.rel (%p469) target = $region44
      $region43: #{ubp_forward.1} parent=39 // pred_region
        %s472 = smul.u32 2, %s16
      $region44: #{ubp_forward.1} parent=39 // pred_fallthru
        _
    $region40: #{ubp_forward.1} parent=5 // pred_fallthru
      _
    %p473 = scmp.le.s32.totalorder 2, %s11
    // Predicated region
    $region45: #{ubp_forward.1} parent=5 // pred_check
      %p474 = pneg %p473
    $region46: #{ubp_forward.1} parent=5 // pred_check_branch
      %476 = sbr.rel (%p474) target = $region48
    $region47: #{ubp_forward.1} parent=5 // pred_region
      %s477 = ssub.s32 %s11, 2
      // Predicated region
      $region49: #{ubp_forward.1} parent=47 // pred_check
        %p478 = pneg %p150
      $region50: #{ubp_forward.1} parent=47 // pred_check_branch
        %480 = sbr.rel (%p478) target = $region52
      $region51: #{ubp_forward.1} parent=47 // pred_region
        %s481 = smul.u32 2, %s17
        %p482 = scmp.lt.s32.totalorder %s481, 7
        %s483 = scalar_select %p482, %s481, 7
        %s484 = smul.addr %s483, 8
        %s485 = scalar_lea.vmem %s5, %s484
      $region52: #{ubp_forward.1} parent=47 // pred_fallthru
        _
    $region48: #{ubp_forward.1} parent=5 // pred_fallthru
      _
  $region6: #{ubp_forward.1} parent=0 // loop_footer
    %s15 = sadd.s32 1, %s11
  $region7: #{ubp_forward.1} parent=0 // loop_footer_branch
    %10 = sbr.rel target = $region3
  $region8: #{ubp_forward.1} parent=0 // loop_exit
    _

</llo_original>
